<compile_context>
chip_gen: v7x
topology: tpu7x:2x2x1
jax: 0.10.0
libtpu: 0.0.40
codegen_flags: <defaults>
</compile_context>

<pallas_src>
import jax
import jax.numpy as jnp
from jax.experimental import pallas as pl
from jax.experimental.pallas import tpu as pltpu

B = 8     # batch (must stay a multiple of 8 -> f32 sublane tile)
H = 128   # encoder hidden / number of tuning centers
K = 128   # decoder output bins (density estimate support)

# row indices inside the packed (8, H) row-vector tile
_R_MUX, _R_MUY, _R_BENC, _R_WX, _R_WY, _R_B1, _R_B2 = range(7)


# --------------------------- fused forward kernel ---------------------------
def model_kernel(
    scal_ref,   # SMEM f32[4]  : cos(theta), sin(theta), 1/(2sx^2), 1/(2sy^2)
    xy_ref,     # VMEM f32[B,2]: xs | ys
    rows_ref,   # VMEM f32[8,H]: mu_x, mu_y, b_enc, wx, wy, b1, b2, pad
    w_ref,      # VMEM bf16[3,H,H]: w_enc, w1, w2
    act_ref,    # out  f32[B,H]
    rho_ref,    # out  f32[B,K]
):
    c = scal_ref[0]
    s = scal_ref[1]
    inv2sx = scal_ref[2]
    inv2sy = scal_ref[3]

    xy = xy_ref[...]                        # (B, 2)
    xs = xy[:, 0:1]                         # (B, 1)
    ys = xy[:, 1:2]                         # (B, 1)

    rows = rows_ref[...]                    # (8, H) single sublane tile
    mu_x = rows[_R_MUX:_R_MUX + 1, :]       # (1, H)
    mu_y = rows[_R_MUY:_R_MUY + 1, :]
    b_enc = rows[_R_BENC:_R_BENC + 1, :]
    wx = rows[_R_WX:_R_WX + 1, :]
    wy = rows[_R_WY:_R_WY + 1, :]
    b1 = rows[_R_B1:_R_B1 + 1, :]
    b2 = rows[_R_B2:_R_B2 + 1, :]

    # ----- encoder: rotated anisotropic Gaussian bumps -> linear -> tanh -----
    dx = xs - mu_x                          # (B, H) broadcast
    dy = ys - mu_y
    rx = c * dx + s * dy                    # rotate offsets by theta
    ry = -s * dx + c * dy
    # scalar reciprocals hoisted to the wrapper: pure VPU mul-adds + one exp
    gauss = jnp.exp(-(rx * rx * inv2sx + ry * ry * inv2sy))

    act = jnp.tanh(
        jnp.dot(gauss.astype(jnp.bfloat16), w_ref[0],
                preferred_element_type=jnp.float32)
        + b_enc
    )
    act_ref[...] = act                      # activation output; stays live in vregs

    # ----- decoder: MLP(activation, xs, ys) -> softmax ----------------------
    # xs/ys linear terms folded into one bias tile (overlaps with MXU matmul)
    bias1 = xs * wx + ys * wy + b1
    h = jnp.tanh(
        jnp.dot(act.astype(jnp.bfloat16), w_ref[1],
                preferred_element_type=jnp.float32)
        + bias1
    )

    logits = (
        jnp.dot(h.astype(jnp.bfloat16), w_ref[2],
                preferred_element_type=jnp.float32)
        + b2
    )

    # numerically stable softmax over the K output bins
    m = jnp.max(logits, axis=-1, keepdims=True)
    e = jnp.exp(logits - m)
    denom = jnp.sum(e, axis=-1, keepdims=True)
    rho_ref[...] = e / denom


_VMEM = pl.BlockSpec(memory_space=pltpu.MemorySpace.VMEM)
_SMEM = pl.BlockSpec(memory_space=pltpu.MemorySpace.SMEM)

_COST = pl.CostEstimate(
    flops=2 * B * H * H + 2 * B * H * H + 2 * B * H * K,   # three MXU matmuls
    transcendentals=4 * B * H,                              # exp + 2x tanh + softmax exp
    bytes_accessed=(3 * H * H) * 2 + (8 * H + 2 * B) * 4 + (B * H + B * K) * 4,
)


def pack_params(params):
    """One-time packing of named params into the kernel's consolidated layout."""
    rows = jnp.concatenate(
        [params["mu_x"], params["mu_y"], params["b_enc"],
         params["wx"], params["wy"], params["b1"], params["b2"],
         jnp.zeros((1, H), jnp.float32)],                    # pad to 8 sublanes
        axis=0,
    )                                                        # (8, H) f32
    weights = jnp.stack(
        [params["w_enc"], params["w1"], params["w2"]], axis=0
    ).astype(jnp.bfloat16)                                   # (3, H, H) bf16
    return {"rows": rows, "weights": weights}


def model_forward(batch_size, theta, xs, ys, sigma_x, sigma_y, packed):
    """Mirrors Model.forward: returns (activation, rho_hat). Single fused call."""
    del batch_size  # shapes are carried by xs / ys (B fixed at 8)

    theta = jnp.asarray(theta, jnp.float32).reshape(())
    sigma_x = jnp.asarray(sigma_x, jnp.float32).reshape(())
    sigma_y = jnp.asarray(sigma_y, jnp.float32).reshape(())

    # scalar precompute on the wrapper side (removes trig / divides from the
    # kernel's EUP critical path), packed into one SMEM array
    scalars = jnp.stack([
        jnp.cos(theta),
        jnp.sin(theta),
        1.0 / (2.0 * sigma_x * sigma_x),
        1.0 / (2.0 * sigma_y * sigma_y),
    ])                                                        # (4,) f32

    xy = jnp.concatenate([xs, ys], axis=1)                    # (B, 2) f32

    activation, rho_hat = pl.pallas_call(
        model_kernel,
        out_shape=(
            jax.ShapeDtypeStruct((B, H), jnp.float32),
            jax.ShapeDtypeStruct((B, K), jnp.float32),
        ),
        in_specs=[_SMEM, _VMEM, _VMEM, _VMEM],
        out_specs=(_VMEM, _VMEM),
        cost_estimate=_COST,
    )(scalars, xy, packed["rows"], packed["weights"])
    return activation, rho_hat


def init_params(key):
    ks = jax.random.split(key, 8)
    scale = 0.1
    return {
        # encoder
        "mu_x": jax.random.uniform(ks[0], (1, H), jnp.float32, -1.0, 1.0),
        "mu_y": jax.random.uniform(ks[1], (1, H), jnp.float32, -1.0, 1.0),
        "w_enc": scale * jax.random.normal(ks[2], (H, H), jnp.float32),
        "b_enc": jnp.zeros((1, H), jnp.float32),
        # decoder
        "w1": scale * jax.random.normal(ks[3], (H, H), jnp.float32),
        "wx": scale * jax.random.normal(ks[4], (1, H), jnp.float32),
        "wy": scale * jax.random.normal(ks[5], (1, H), jnp.float32),
        "b1": jnp.zeros((1, H), jnp.float32),
        "w2": scale * jax.random.normal(ks[6], (H, K), jnp.float32),
        "b2": jnp.zeros((1, K), jnp.float32),
    }


if __name__ == "__main__":
    key = jax.random.PRNGKey(0)
    k_in, k_par = jax.random.split(key)
    kx, ky = jax.random.split(k_in)

    params = init_params(k_par)
    packed = pack_params(params)     # one-time packing (1 rows tile + 1 bf16 weight stack)

    xs = jax.random.uniform(kx, (B, 1), jnp.float32, -1.0, 1.0)
    ys = jax.random.uniform(ky, (B, 1), jnp.float32, -1.0, 1.0)
    theta = jnp.float32(0.3)
    sigma_x = jnp.float32(0.5)
    sigma_y = jnp.float32(0.7)

    activation, rho_hat = model_forward(B, theta, xs, ys, sigma_x, sigma_y, packed)
    jax.block_until_ready((activation, rho_hat))

    assert activation.shape == (B, H)
    assert rho_hat.shape == (B, K)
    # softmax rows sum to 1
    assert jnp.allclose(jnp.sum(rho_hat, axis=-1), 1.0, atol=1e-4)
    assert bool(jnp.all(jnp.isfinite(activation)))
    assert bool(jnp.all(rho_hat >= 0.0))
    print("KERNEL_OK")
</pallas_src>

<mosaic_0001>
module attributes {stable_mosaic.version = 11 : i64} {
  func.func @model_kernel(%arg0: memref<4xf32, #tpu.memory_space<smem>>, %arg1: memref<8x2xf32, #tpu.memory_space<vmem>>, %arg2: memref<8x128xf32, #tpu.memory_space<vmem>>, %arg3: memref<3x128x128xbf16, #tpu.memory_space<vmem>>, %arg4: memref<8x128xf32, #tpu.memory_space<vmem>>, %arg5: memref<8x128xf32, #tpu.memory_space<vmem>>) attributes {dimension_semantics = [], scalar_prefetch = 0 : i64, scratch_operands = 0 : i64, tpu.core_type = #tpu.core_type<tc>} {
    %c0 = arith.constant 0 : index
    %0 = memref.load %arg0[%c0] : memref<4xf32, #tpu.memory_space<smem>>
    %c1 = arith.constant 1 : index
    %1 = memref.load %arg0[%c1] : memref<4xf32, #tpu.memory_space<smem>>
    %c2 = arith.constant 2 : index
    %2 = memref.load %arg0[%c2] : memref<4xf32, #tpu.memory_space<smem>>
    %c3 = arith.constant 3 : index
    %3 = memref.load %arg0[%c3] : memref<4xf32, #tpu.memory_space<smem>>
    %c0_0 = arith.constant 0 : index
    %c0_1 = arith.constant 0 : index
    %4 = vector.load %arg1[%c0_0, %c0_1] : memref<8x2xf32, #tpu.memory_space<vmem>>, vector<8x2xf32>
    %5 = vector.extract_strided_slice %4 {offsets = [0, 0], sizes = [8, 1], strides = [1, 1]} : vector<8x2xf32> to vector<8x1xf32>
    %6 = vector.extract_strided_slice %4 {offsets = [0, 1], sizes = [8, 1], strides = [1, 1]} : vector<8x2xf32> to vector<8x1xf32>
    %c0_2 = arith.constant 0 : index
    %c0_3 = arith.constant 0 : index
    %7 = vector.load %arg2[%c0_2, %c0_3] : memref<8x128xf32, #tpu.memory_space<vmem>>, vector<8x128xf32>
    %8 = vector.extract_strided_slice %7 {offsets = [0, 0], sizes = [1, 128], strides = [1, 1]} : vector<8x128xf32> to vector<1x128xf32>
    %9 = vector.extract_strided_slice %7 {offsets = [1, 0], sizes = [1, 128], strides = [1, 1]} : vector<8x128xf32> to vector<1x128xf32>
    %10 = vector.extract_strided_slice %7 {offsets = [2, 0], sizes = [1, 128], strides = [1, 1]} : vector<8x128xf32> to vector<1x128xf32>
    %11 = vector.extract_strided_slice %7 {offsets = [3, 0], sizes = [1, 128], strides = [1, 1]} : vector<8x128xf32> to vector<1x128xf32>
    %12 = vector.extract_strided_slice %7 {offsets = [4, 0], sizes = [1, 128], strides = [1, 1]} : vector<8x128xf32> to vector<1x128xf32>
    %13 = vector.extract_strided_slice %7 {offsets = [5, 0], sizes = [1, 128], strides = [1, 1]} : vector<8x128xf32> to vector<1x128xf32>
    %14 = vector.extract_strided_slice %7 {offsets = [6, 0], sizes = [1, 128], strides = [1, 1]} : vector<8x128xf32> to vector<1x128xf32>
    %15 = vector.broadcast %5 : vector<8x1xf32> to vector<8x128xf32>
    %16 = vector.broadcast %8 : vector<1x128xf32> to vector<8x128xf32>
    %17 = arith.subf %15, %16 : vector<8x128xf32>
    %18 = vector.broadcast %6 : vector<8x1xf32> to vector<8x128xf32>
    %19 = vector.broadcast %9 : vector<1x128xf32> to vector<8x128xf32>
    %20 = arith.subf %18, %19 : vector<8x128xf32>
    %21 = vector.broadcast %0 : f32 to vector<8x128xf32>
    %22 = arith.mulf %21, %17 : vector<8x128xf32>
    %23 = vector.broadcast %1 : f32 to vector<8x128xf32>
    %24 = arith.mulf %23, %20 : vector<8x128xf32>
    %25 = arith.addf %22, %24 : vector<8x128xf32>
    %cst = arith.constant 0.000000e+00 : f32
    %26 = arith.subf %cst, %1 : f32
    %27 = vector.broadcast %26 : f32 to vector<8x128xf32>
    %28 = arith.mulf %27, %17 : vector<8x128xf32>
    %29 = vector.broadcast %0 : f32 to vector<8x128xf32>
    %30 = arith.mulf %29, %20 : vector<8x128xf32>
    %31 = arith.addf %28, %30 : vector<8x128xf32>
    %32 = arith.mulf %25, %25 : vector<8x128xf32>
    %33 = vector.broadcast %2 : f32 to vector<8x128xf32>
    %34 = arith.mulf %32, %33 : vector<8x128xf32>
    %35 = arith.mulf %31, %31 : vector<8x128xf32>
    %36 = vector.broadcast %3 : f32 to vector<8x128xf32>
    %37 = arith.mulf %35, %36 : vector<8x128xf32>
    %38 = arith.addf %34, %37 : vector<8x128xf32>
    %cst_4 = arith.constant 0.000000e+00 : f32
    %39 = vector.broadcast %cst_4 : f32 to vector<8x128xf32>
    %40 = arith.subf %39, %38 : vector<8x128xf32>
    %41 = math.exp %40 : vector<8x128xf32>
    %42 = arith.truncf %41 : vector<8x128xf32> to vector<8x128xbf16>
    %c0_5 = arith.constant 0 : index
    %c0_6 = arith.constant 0 : index
    %c0_7 = arith.constant 0 : index
    %43 = vector.load %arg3[%c0_5, %c0_6, %c0_7] : memref<3x128x128xbf16, #tpu.memory_space<vmem>>, vector<1x128x128xbf16>
    %44 = vector.shape_cast %43 : vector<1x128x128xbf16> to vector<128x128xbf16>
    %cst_8 = arith.constant dense<0.000000e+00> : vector<8x128xf32>
    %45 = tpu.matmul %42, %44, %cst_8 {dimension_numbers = #tpu.dot_dimension_numbers<[1], [0], [0], [1], [0, 0, 1, 1], [], []>} : vector<8x128xbf16>, vector<128x128xbf16>, vector<8x128xf32> -> vector<8x128xf32>
    %46 = vector.broadcast %10 : vector<1x128xf32> to vector<8x128xf32>
    %47 = arith.addf %45, %46 : vector<8x128xf32>
    %48 = math.tanh %47 : vector<8x128xf32>
    %c0_9 = arith.constant 0 : index
    %c0_10 = arith.constant 0 : index
    %49 = vector.load %arg4[%c0_9, %c0_10] : memref<8x128xf32, #tpu.memory_space<vmem>>, vector<8x128xf32>
    tpu.vector_store %arg4[%c0_9, %c0_10], %48 {strides = array<i32>} : memref<8x128xf32, #tpu.memory_space<vmem>>, vector<8x128xf32>,
    %50 = vector.broadcast %5 : vector<8x1xf32> to vector<8x128xf32>
    %51 = vector.broadcast %11 : vector<1x128xf32> to vector<8x128xf32>
    %52 = arith.mulf %50, %51 : vector<8x128xf32>
    %53 = vector.broadcast %6 : vector<8x1xf32> to vector<8x128xf32>
    %54 = vector.broadcast %12 : vector<1x128xf32> to vector<8x128xf32>
    %55 = arith.mulf %53, %54 : vector<8x128xf32>
    %56 = arith.addf %52, %55 : vector<8x128xf32>
    %57 = vector.broadcast %13 : vector<1x128xf32> to vector<8x128xf32>
    %58 = arith.addf %56, %57 : vector<8x128xf32>
    %59 = arith.truncf %48 : vector<8x128xf32> to vector<8x128xbf16>
    %c1_11 = arith.constant 1 : index
    %c0_12 = arith.constant 0 : index
    %c0_13 = arith.constant 0 : index
    %60 = vector.load %arg3[%c1_11, %c0_12, %c0_13] : memref<3x128x128xbf16, #tpu.memory_space<vmem>>, vector<1x128x128xbf16>
    %61 = vector.shape_cast %60 : vector<1x128x128xbf16> to vector<128x128xbf16>
    %cst_14 = arith.constant dense<0.000000e+00> : vector<8x128xf32>
    %62 = tpu.matmul %59, %61, %cst_14 {dimension_numbers = #tpu.dot_dimension_numbers<[1], [0], [0], [1], [0, 0, 1, 1], [], []>} : vector<8x128xbf16>, vector<128x128xbf16>, vector<8x128xf32> -> vector<8x128xf32>
    %63 = arith.addf %62, %58 : vector<8x128xf32>
    %64 = math.tanh %63 : vector<8x128xf32>
    %65 = arith.truncf %64 : vector<8x128xf32> to vector<8x128xbf16>
    %c2_15 = arith.constant 2 : index
    %c0_16 = arith.constant 0 : index
    %c0_17 = arith.constant 0 : index
    %66 = vector.load %arg3[%c2_15, %c0_16, %c0_17] : memref<3x128x128xbf16, #tpu.memory_space<vmem>>, vector<1x128x128xbf16>
    %67 = vector.shape_cast %66 : vector<1x128x128xbf16> to vector<128x128xbf16>
    %cst_18 = arith.constant dense<0.000000e+00> : vector<8x128xf32>
    %68 = tpu.matmul %65, %67, %cst_18 {dimension_numbers = #tpu.dot_dimension_numbers<[1], [0], [0], [1], [0, 0, 1, 1], [], []>} : vector<8x128xbf16>, vector<128x128xbf16>, vector<8x128xf32> -> vector<8x128xf32>
    %69 = vector.broadcast %14 : vector<1x128xf32> to vector<8x128xf32>
    %70 = arith.addf %68, %69 : vector<8x128xf32>
    %cst_19 = arith.constant dense<0xFF800000> : vector<8xf32>
    %71 = vector.multi_reduction <maximumf>, %70, %cst_19 [1] : vector<8x128xf32> to vector<8xf32>
    %72 = vector.shape_cast %71 : vector<8xf32> to vector<8x1xf32>
    %73 = vector.broadcast %72 : vector<8x1xf32> to vector<8x128xf32>
    %74 = arith.subf %70, %73 : vector<8x128xf32>
    %75 = math.exp %74 : vector<8x128xf32>
    %cst_20 = arith.constant dense<0.000000e+00> : vector<8xf32>
    %76 = vector.multi_reduction <add>, %75, %cst_20 [1] : vector<8x128xf32> to vector<8xf32>
    %77 = vector.shape_cast %76 : vector<8xf32> to vector<8x1xf32>
    %78 = vector.broadcast %77 : vector<8x1xf32> to vector<8x128xf32>
    %79 = arith.divf %75, %78 : vector<8x128xf32>
    %c0_21 = arith.constant 0 : index
    %c0_22 = arith.constant 0 : index
    %80 = vector.load %arg5[%c0_21, %c0_22] : memref<8x128xf32, #tpu.memory_space<vmem>>, vector<8x128xf32>
    tpu.vector_store %arg5[%c0_21, %c0_22], %79 {strides = array<i32>} : memref<8x128xf32, #tpu.memory_space<vmem>>, vector<8x128xf32>,
    return
  }
}

</mosaic_0001>

<llo_original>
// kernel: tpu_custom_call.1
$region0: #{tpu_custom_call.1}
  #allocation0 [shape = 'u32[]', space=smem, size = 0x4, offset = 0x4, fixed_abs, tag = 'smem constant byte address 0x4 - core index']
  #allocation1 [shape = 'u32[144,128]{1,0:T(1,128)}', space=vmem, size = 0x12000, scoped, tag = 'internal scratch']
  %s0 = inlined_call_operand.vmem [shape: f32[4], index: 0, kind: input, shape index: {}]
  %s1 = inlined_call_operand.vmem [shape: f32[8,2], index: 1, kind: input, shape index: {}]
  %s2 = inlined_call_operand.vmem [shape: f32[8,128], index: 2, kind: input, shape index: {}]
  %s3 = inlined_call_operand.hbm [shape: bf16[3,128,128], index: 3, kind: input, shape index: {}]
  %s4 = inlined_call_operand.hbm [shape: f32[8,128], index: 4, kind: output, shape index: {0}]
  %s5 = inlined_call_operand.hbm [shape: f32[8,128], index: 5, kind: output, shape index: {1}]
  %6 = xla_tuple %s4, %s5
  %s7 = sld [smem:[#allocation0]]
  $region42: #{tpu_custom_call.1} parent=0
    _
  %s9 = ssub.s32 1, %s7
  %s10 = scalar_select 0, %s9, %s7
  $region1: #{tpu_custom_call.1} parent=0
    #allocation2 [shape = 'u8[512]{0}', space=smem, size = 0x200, scoped, tag = 'input window, operand 0, single buffered']
    #allocation3 [shape = 's32[1]{0}', space=sflag, size = 0x4, scoped, tag = 'scoped memory for tpu_custom_call.1']
    #allocation4 [shape = 's32[1]{0}', space=sflag, size = 0x4, scoped, tag = 'scoped memory for tpu_custom_call.1']
    #allocation5 [shape = 's32[1]{0}', space=sflag, size = 0x4, scoped, tag = 'scoped memory for tpu_custom_call.1']
    #allocation6 [shape = 'u8[98304]{0}', space=vmem, size = 0x18000, scoped, tag = 'input window, operand 3, single buffered']
    #allocation7 [shape = 'u8[4096]{0}', space=vmem, size = 0x1000, scoped, tag = 'output window, operand 0, single buffered']
    #allocation8 [shape = 'u8[4096]{0}', space=vmem, size = 0x1000, scoped, tag = 'output window, operand 1, single buffered']
    #allocation9 [shape = 's32[1]{0}', space=sflag, size = 0x4, scoped, tag = 'scoped memory for tpu_custom_call.1']
    %11 = vsyncpa [#allocation5], 0
    %12 = vsyncpa [#allocation3], 0
    %13 = vsyncpa [#allocation4], 0
    %14 = vsyncpa [#allocation9], 0
    // Predicated region
    $region2: #{tpu_custom_call.1} parent=1 // pred_check
      _
    $region3: #{tpu_custom_call.1} parent=1 // pred_check_branch
      %16 = sbr.rel (0) target = $region5
    $region4: #{tpu_custom_call.1} parent=1 // pred_region
      %s18 = ssub.s32 16, 16
      %19 = vsyncadd [#allocation5], %s18
      %s21 = sshll.u32 %s0, 4
      %s22 = int_to_ptr.vmem [resolvable:$true] %s21
      %24 = dma.vmem_to_smem %s22, 16, [#allocation2], [#allocation5]
    $region5: #{tpu_custom_call.1} parent=1 // pred_fallthru
      _
    // Predicated region
    $region6: #{tpu_custom_call.1} parent=1 // pred_check
      _
    $region7: #{tpu_custom_call.1} parent=1 // pred_check_branch
      %26 = sbr.rel (0) target = $region9
    $region8: #{tpu_custom_call.1} parent=1 // pred_region
      _
    $region9: #{tpu_custom_call.1} parent=1 // pred_fallthru
      _
    // Predicated region
    $region10: #{tpu_custom_call.1} parent=1 // pred_check
      _
    $region11: #{tpu_custom_call.1} parent=1 // pred_check_branch
      %28 = sbr.rel (0) target = $region13
    $region12: #{tpu_custom_call.1} parent=1 // pred_region
      _
    $region13: #{tpu_custom_call.1} parent=1 // pred_fallthru
      _
    // Predicated region
    $region14: #{tpu_custom_call.1} parent=1 // pred_check
      _
    $region15: #{tpu_custom_call.1} parent=1 // pred_check_branch
      %30 = sbr.rel (0) target = $region17
    $region16: #{tpu_custom_call.1} parent=1 // pred_region
      %s32 = ssub.s32 3072, 3072
      %33 = vsyncadd [#allocation3], %s32
      %s34 = sshll.u32 [#allocation6], 4
      %s35 = int_to_ptr.vmem [resolvable:$true] %s34
      %40 = dma.hbm_to_vmem [thread:$0]  %s3, 3072, %s35, [#allocation3], 64, 64, 4
    $region17: #{tpu_custom_call.1} parent=1 // pred_fallthru
      _
    // Predicated region
    $region18: #{tpu_custom_call.1} parent=1 // pred_check
      _
    $region19: #{tpu_custom_call.1} parent=1 // pred_check_branch
      %42 = sbr.rel (0) target = $region21
    $region20: #{tpu_custom_call.1} parent=1 // pred_region
      %43 = dma.done [#allocation5], 16
    $region21: #{tpu_custom_call.1} parent=1 // pred_fallthru
      _
    // Predicated region
    $region22: #{tpu_custom_call.1} parent=1 // pred_check
      _
    $region23: #{tpu_custom_call.1} parent=1 // pred_check_branch
      %45 = sbr.rel (0) target = $region25
    $region24: #{tpu_custom_call.1} parent=1 // pred_region
      %46 = dma.done [#allocation3], 3072
    $region25: #{tpu_custom_call.1} parent=1 // pred_fallthru
      _
    %47 = sfence
    %s49 = sld [smem:[#allocation2]]
    %s50 = sld [smem:[#allocation2 + $0x1]]
    %s51 = sld [smem:[#allocation2 + $0x2]]
    %s52 = sld [smem:[#allocation2 + $0x3]]
    %v53 = vld [vmem:[%s1] sm:$0xff]
    %v54 = vld [vmem:[%s2] sm:$0xff]
    %56 = vset.pattern.permute.xlu0 0
    %57 = vperm.xlu0 %56, %v53
    %v58 = vpop.permute.xlu0 %57
    %v60 = vlaneseq
    %v61 = vshrl.u32 %v60, 7
    %v62 = vsub.s32 0, %v61
    %v63 = vrot.slane %v54, %v62
    %v64 = vsub.f32 %v58, %v63
    %65 = vset.pattern.permute.xlu0 1
    %66 = vperm.xlu0 %65, %v53
    %v67 = vpop.permute.xlu0 %66
    %v69 = vlaneseq
    %v70 = vshrl.u32 %v69, 7
    %v71 = vsub.s32 1, %v70
    %v72 = vrot.slane %v54, %v71
    %v73 = vsub.f32 %v67, %v72
    %v74 = vstv %s49
    %v75 = vmul.f32 %v74, %v64
    %v76 = vstv %s50
    %v77 = vmul.f32 %v76, %v73
    %v78 = vadd.f32 %v75, %v77
    %s79 = ssub.f32 0.0, %s50
    %v80 = vstv %s79
    %v81 = vmul.f32 %v80, %v64
    %v82 = vmul.f32 %v74, %v73
    %v83 = vadd.f32 %v81, %v82
    %v84 = vmul.f32 %v78, %v78
    %v85 = vstv %s51
    %v86 = vmul.f32 %v84, %v85
    %v87 = vmul.f32 %v83, %v83
    %v88 = vstv %s52
    %v89 = vmul.f32 %v87, %v88
    %v90 = vadd.f32 %v86, %v89
    %v91 = vsub.f32 0.0, %v90
    %v92 = vmul.f32 %v91, 1.442695
    %v93 = vpow.pop %v92
    %v94 = vpack.c.bf16 %v93, %v93
    %v95 = vld [vmem:[#allocation6] sm:$0xf]
    %v96 = vld [vmem:[#allocation6 + $0x4] sm:$0xf]
    %v97 = vld [vmem:[#allocation6 + $0x8] sm:$0xf]
    %v98 = vld [vmem:[#allocation6 + $0xc] sm:$0xf]
    %v99 = vld [vmem:[#allocation6 + $0x10] sm:$0xf]
    %v100 = vld [vmem:[#allocation6 + $0x14] sm:$0xf]
    %v101 = vld [vmem:[#allocation6 + $0x18] sm:$0xf]
    %v102 = vld [vmem:[#allocation6 + $0x1c] sm:$0xf]
    %v103 = vld [vmem:[#allocation6 + $0x20] sm:$0xf]
    %v104 = vld [vmem:[#allocation6 + $0x24] sm:$0xf]
    %v105 = vld [vmem:[#allocation6 + $0x28] sm:$0xf]
    %v106 = vld [vmem:[#allocation6 + $0x2c] sm:$0xf]
    %v107 = vld [vmem:[#allocation6 + $0x30] sm:$0xf]
    %v108 = vld [vmem:[#allocation6 + $0x34] sm:$0xf]
    %v109 = vld [vmem:[#allocation6 + $0x38] sm:$0xf]
    %v110 = vld [vmem:[#allocation6 + $0x3c] sm:$0xf]
    %v111 = vlaneseq
    %v112 = vshrl.u32 %v111, 7
    %v113 = vsub.s32 2, %v112
    %v114 = vrot.slane %v54, %v113
    %v131 = vunpack.c.l.b16 %v95
    %v132 = vunpack.c.l.b16 %v96
    %v133 = vunpack.c.l.b16 %v97
    %v134 = vunpack.c.l.b16 %v98
    %v135 = vunpack.c.l.b16 %v99
    %v136 = vunpack.c.l.b16 %v100
    %v137 = vunpack.c.l.b16 %v101
    %v138 = vunpack.c.l.b16 %v102
    %v139 = vunpack.c.l.b16 %v103
    %v140 = vunpack.c.l.b16 %v104
    %v141 = vunpack.c.l.b16 %v105
    %v142 = vunpack.c.l.b16 %v106
    %v143 = vunpack.c.l.b16 %v107
    %v144 = vunpack.c.l.b16 %v108
    %v145 = vunpack.c.l.b16 %v109
    %v146 = vunpack.c.l.b16 %v110
    %v147 = vpack.c.b16 %v132, %v131
    %v148 = vpack.c.b16 %v134, %v133
    %v149 = vpack.c.b16 %v136, %v135
    %v150 = vpack.c.b16 %v138, %v137
    %v151 = vpack.c.b16 %v140, %v139
    %v152 = vpack.c.b16 %v142, %v141
    %v153 = vpack.c.b16 %v144, %v143
    %v154 = vpack.c.b16 %v146, %v145
    %163 = vmatprep.subr.bf16.mxu0 0
    %164 = vmatpush1.bf16.msra.mxu0 %v147
    %165 = vmatprep.subr.bf16.mxu0 0
    %166 = vmatpush1.bf16.msra.mxu0 %v148
    %167 = vmatprep.subr.bf16.mxu0 0
    %168 = vmatpush1.bf16.msra.mxu0 %v149
    %169 = vmatprep.subr.bf16.mxu0 0
    %170 = vmatpush1.bf16.msra.mxu0 %v150
    %171 = vmatprep.subr.bf16.mxu0 0
    %172 = vmatpush1.bf16.msra.mxu0 %v151
    %173 = vmatprep.subr.bf16.mxu0 0
    %174 = vmatpush1.bf16.msra.mxu0 %v152
    %175 = vmatprep.subr.bf16.mxu0 0
    %176 = vmatpush1.bf16.msra.mxu0 %v153
    %177 = vmatprep.subr.bf16.mxu0 0
    %178 = vmatpush1.bf16.msra.mxu0 %v154
    %179 = vmatprep.subr.bf16.mxu0 0
    %180 = vmatpush1.bf16.msra.mxu0 0
    %181 = vmatprep.subr.bf16.mxu0 0
    %182 = vmatpush1.bf16.msra.mxu0 0
    %183 = vmatprep.subr.bf16.mxu0 0
    %184 = vmatpush1.bf16.msra.mxu0 0
    %185 = vmatprep.subr.bf16.mxu0 0
    %186 = vmatpush1.bf16.msra.mxu0 0
    %187 = vmatprep.subr.bf16.mxu0 0
    %188 = vmatpush1.bf16.msra.mxu0 0
    %189 = vmatprep.subr.bf16.mxu0 0
    %190 = vmatpush1.bf16.msra.mxu0 0
    %191 = vmatprep.subr.bf16.mxu0 0
    %192 = vmatpush1.bf16.msra.mxu0 0
    %193 = vmatprep.subr.bf16.mxu0 0
    %194 = vmatpush1.bf16.msra.mxu0 0
    %195 = vmatprep.mubr.bf16.mxu0 0
    %196 = vmatmul.mubr.bf16.gmra.mrb[0].mxu0 %v94
    %v197 = vpop.f32.mrb[0].mxu0
    %v198 = vadd.f32 %v114, %v197
    %v199 = vpop.f32.mrb[0].mxu0
    %v200 = vpop.f32.mrb[0].mxu0
    %v201 = vpop.f32.mrb[0].mxu0
    %202 = vdwg.mxu0
    %v203 = vtanh.pop %v198
    %204 = vst [vmem:[#allocation7] sm:$0xff] %v203
    %v205 = vlaneseq
    %v206 = vshrl.u32 %v205, 7
    %v207 = vsub.s32 3, %v206
    %v208 = vrot.slane %v54, %v207
    %v209 = vmul.f32 %v58, %v208
    %v210 = vlaneseq
    %v211 = vshrl.u32 %v210, 7
    %v212 = vsub.s32 4, %v211
    %v213 = vrot.slane %v54, %v212
    %v214 = vmul.f32 %v67, %v213
    %v215 = vadd.f32 %v209, %v214
    %v216 = vlaneseq
    %v217 = vshrl.u32 %v216, 7
    %v218 = vsub.s32 5, %v217
    %v219 = vrot.slane %v54, %v218
    %v220 = vadd.f32 %v215, %v219
    %v221 = vpack.c.bf16 %v203, %v203
    %s222 = scalar_lea.vmem [#allocation6], 64
    %v223 = vld [vmem:[%s222] sm:$0xf]
    %v224 = vld [vmem:[%s222 + $0x4] sm:$0xf]
    %v225 = vld [vmem:[%s222 + $0x8] sm:$0xf]
    %v226 = vld [vmem:[%s222 + $0xc] sm:$0xf]
    %v227 = vld [vmem:[%s222 + $0x10] sm:$0xf]
    %v228 = vld [vmem:[%s222 + $0x14] sm:$0xf]
    %v229 = vld [vmem:[%s222 + $0x18] sm:$0xf]
    %v230 = vld [vmem:[%s222 + $0x1c] sm:$0xf]
    %v231 = vld [vmem:[%s222 + $0x20] sm:$0xf]
    %v232 = vld [vmem:[%s222 + $0x24] sm:$0xf]
    %v233 = vld [vmem:[%s222 + $0x28] sm:$0xf]
    %v234 = vld [vmem:[%s222 + $0x2c] sm:$0xf]
    %v235 = vld [vmem:[%s222 + $0x30] sm:$0xf]
    %v236 = vld [vmem:[%s222 + $0x34] sm:$0xf]
    %v237 = vld [vmem:[%s222 + $0x38] sm:$0xf]
    %v238 = vld [vmem:[%s222 + $0x3c] sm:$0xf]
    %v255 = vunpack.c.l.b16 %v223
    %v256 = vunpack.c.l.b16 %v224
    %v257 = vunpack.c.l.b16 %v225
    %v258 = vunpack.c.l.b16 %v226
    %v259 = vunpack.c.l.b16 %v227
    %v260 = vunpack.c.l.b16 %v228
    %v261 = vunpack.c.l.b16 %v229
    %v262 = vunpack.c.l.b16 %v230
    %v263 = vunpack.c.l.b16 %v231
    %v264 = vunpack.c.l.b16 %v232
    %v265 = vunpack.c.l.b16 %v233
    %v266 = vunpack.c.l.b16 %v234
    %v267 = vunpack.c.l.b16 %v235
    %v268 = vunpack.c.l.b16 %v236
    %v269 = vunpack.c.l.b16 %v237
    %v270 = vunpack.c.l.b16 %v238
    %v271 = vpack.c.b16 %v256, %v255
    %v272 = vpack.c.b16 %v258, %v257
    %v273 = vpack.c.b16 %v260, %v259
    %v274 = vpack.c.b16 %v262, %v261
    %v275 = vpack.c.b16 %v264, %v263
    %v276 = vpack.c.b16 %v266, %v265
    %v277 = vpack.c.b16 %v268, %v267
    %v278 = vpack.c.b16 %v270, %v269
    %287 = vmatprep.subr.bf16.mxu0 0
    %288 = vmatpush1.bf16.msra.mxu0 %v271
    %289 = vmatprep.subr.bf16.mxu0 0
    %290 = vmatpush1.bf16.msra.mxu0 %v272
    %291 = vmatprep.subr.bf16.mxu0 0
    %292 = vmatpush1.bf16.msra.mxu0 %v273
    %293 = vmatprep.subr.bf16.mxu0 0
    %294 = vmatpush1.bf16.msra.mxu0 %v274
    %295 = vmatprep.subr.bf16.mxu0 0
    %296 = vmatpush1.bf16.msra.mxu0 %v275
    %297 = vmatprep.subr.bf16.mxu0 0
    %298 = vmatpush1.bf16.msra.mxu0 %v276
    %299 = vmatprep.subr.bf16.mxu0 0
    %300 = vmatpush1.bf16.msra.mxu0 %v277
    %301 = vmatprep.subr.bf16.mxu0 0
    %302 = vmatpush1.bf16.msra.mxu0 %v278
    %303 = vmatprep.subr.bf16.mxu0 0
    %304 = vmatpush1.bf16.msra.mxu0 0
    %305 = vmatprep.subr.bf16.mxu0 0
    %306 = vmatpush1.bf16.msra.mxu0 0
    %307 = vmatprep.subr.bf16.mxu0 0
    %308 = vmatpush1.bf16.msra.mxu0 0
    %309 = vmatprep.subr.bf16.mxu0 0
    %310 = vmatpush1.bf16.msra.mxu0 0
    %311 = vmatprep.subr.bf16.mxu0 0
    %312 = vmatpush1.bf16.msra.mxu0 0
    %313 = vmatprep.subr.bf16.mxu0 0
    %314 = vmatpush1.bf16.msra.mxu0 0
    %315 = vmatprep.subr.bf16.mxu0 0
    %316 = vmatpush1.bf16.msra.mxu0 0
    %317 = vmatprep.subr.bf16.mxu0 0
    %318 = vmatpush1.bf16.msra.mxu0 0
    %319 = vmatprep.mubr.bf16.mxu0 0
    %320 = vmatmul.mubr.bf16.gmra.mrb[0].mxu0 %v221
    %v321 = vpop.f32.mrb[0].mxu0
    %v322 = vadd.f32 %v220, %v321
    %v323 = vpop.f32.mrb[0].mxu0
    %v324 = vpop.f32.mrb[0].mxu0
    %v325 = vpop.f32.mrb[0].mxu0
    %326 = vdwg.mxu0
    %v327 = vtanh.pop %v322
    %v328 = vpack.c.bf16 %v327, %v327
    %s329 = scalar_lea.vmem [#allocation6], 128
    %v330 = vld [vmem:[%s329] sm:$0xf]
    %v331 = vld [vmem:[%s329 + $0x4] sm:$0xf]
    %v332 = vld [vmem:[%s329 + $0x8] sm:$0xf]
    %v333 = vld [vmem:[%s329 + $0xc] sm:$0xf]
    %v334 = vld [vmem:[%s329 + $0x10] sm:$0xf]
    %v335 = vld [vmem:[%s329 + $0x14] sm:$0xf]
    %v336 = vld [vmem:[%s329 + $0x18] sm:$0xf]
    %v337 = vld [vmem:[%s329 + $0x1c] sm:$0xf]
    %v338 = vld [vmem:[%s329 + $0x20] sm:$0xf]
    %v339 = vld [vmem:[%s329 + $0x24] sm:$0xf]
    %v340 = vld [vmem:[%s329 + $0x28] sm:$0xf]
    %v341 = vld [vmem:[%s329 + $0x2c] sm:$0xf]
    %v342 = vld [vmem:[%s329 + $0x30] sm:$0xf]
    %v343 = vld [vmem:[%s329 + $0x34] sm:$0xf]
    %v344 = vld [vmem:[%s329 + $0x38] sm:$0xf]
    %v345 = vld [vmem:[%s329 + $0x3c] sm:$0xf]
    %v346 = vlaneseq
    %v347 = vshrl.u32 %v346, 7
    %v348 = vsub.s32 6, %v347
    %v349 = vrot.slane %v54, %v348
    %v366 = vunpack.c.l.b16 %v330
    %v367 = vunpack.c.l.b16 %v331
    %v368 = vunpack.c.l.b16 %v332
    %v369 = vunpack.c.l.b16 %v333
    %v370 = vunpack.c.l.b16 %v334
    %v371 = vunpack.c.l.b16 %v335
    %v372 = vunpack.c.l.b16 %v336
    %v373 = vunpack.c.l.b16 %v337
    %v374 = vunpack.c.l.b16 %v338
    %v375 = vunpack.c.l.b16 %v339
    %v376 = vunpack.c.l.b16 %v340
    %v377 = vunpack.c.l.b16 %v341
    %v378 = vunpack.c.l.b16 %v342
    %v379 = vunpack.c.l.b16 %v343
    %v380 = vunpack.c.l.b16 %v344
    %v381 = vunpack.c.l.b16 %v345
    %v382 = vpack.c.b16 %v367, %v366
    %v383 = vpack.c.b16 %v369, %v368
    %v384 = vpack.c.b16 %v371, %v370
    %v385 = vpack.c.b16 %v373, %v372
    %v386 = vpack.c.b16 %v375, %v374
    %v387 = vpack.c.b16 %v377, %v376
    %v388 = vpack.c.b16 %v379, %v378
    %v389 = vpack.c.b16 %v381, %v380
    %398 = vmatprep.subr.bf16.mxu0 0
    %399 = vmatpush1.bf16.msra.mxu0 %v382
    %400 = vmatprep.subr.bf16.mxu0 0
    %401 = vmatpush1.bf16.msra.mxu0 %v383
    %402 = vmatprep.subr.bf16.mxu0 0
    %403 = vmatpush1.bf16.msra.mxu0 %v384
    %404 = vmatprep.subr.bf16.mxu0 0
    %405 = vmatpush1.bf16.msra.mxu0 %v385
    %406 = vmatprep.subr.bf16.mxu0 0
    %407 = vmatpush1.bf16.msra.mxu0 %v386
    %408 = vmatprep.subr.bf16.mxu0 0
    %409 = vmatpush1.bf16.msra.mxu0 %v387
    %410 = vmatprep.subr.bf16.mxu0 0
    %411 = vmatpush1.bf16.msra.mxu0 %v388
    %412 = vmatprep.subr.bf16.mxu0 0
    %413 = vmatpush1.bf16.msra.mxu0 %v389
    %414 = vmatprep.subr.bf16.mxu0 0
    %415 = vmatpush1.bf16.msra.mxu0 0
    %416 = vmatprep.subr.bf16.mxu0 0
    %417 = vmatpush1.bf16.msra.mxu0 0
    %418 = vmatprep.subr.bf16.mxu0 0
    %419 = vmatpush1.bf16.msra.mxu0 0
    %420 = vmatprep.subr.bf16.mxu0 0
    %421 = vmatpush1.bf16.msra.mxu0 0
    %422 = vmatprep.subr.bf16.mxu0 0
    %423 = vmatpush1.bf16.msra.mxu0 0
    %424 = vmatprep.subr.bf16.mxu0 0
    %425 = vmatpush1.bf16.msra.mxu0 0
    %426 = vmatprep.subr.bf16.mxu0 0
    %427 = vmatpush1.bf16.msra.mxu0 0
    %428 = vmatprep.subr.bf16.mxu0 0
    %429 = vmatpush1.bf16.msra.mxu0 0
    %430 = vmatprep.mubr.bf16.mxu0 0
    %431 = vmatmul.mubr.bf16.gmra.mrb[0].mxu0 %v328
    %v432 = vpop.f32.mrb[0].mxu0
    %v433 = vadd.f32 %v349, %v432
    %v434 = vpop.f32.mrb[0].mxu0
    %v435 = vpop.f32.mrb[0].mxu0
    %v436 = vpop.f32.mrb[0].mxu0
    %437 = vdwg.mxu0
    %438 = vmax.xlane.f32.xlu0 %v433
    %v439 = vpop.xlane.xlu0 %438
    %v440 = vsub.f32 %v433, %v439
    %v441 = vmul.f32 %v440, 1.442695
    %v442 = vpow.pop %v441
    %443 = vadd.xlane.f32.xlu0 %v442
    %v444 = vpop.xlane.xlu0 %443
    %v445 = vrcp.pop %v444
    %v446 = vmul.f32 %v442, %v445
    %447 = vst [vmem:[#allocation8] sm:$0xff] %v446
    // Predicated region
    $region26: #{tpu_custom_call.1} parent=1 // pred_check
      _
    $region27: #{tpu_custom_call.1} parent=1 // pred_check_branch
      %449 = sbr.rel (0) target = $region29
    $region28: #{tpu_custom_call.1} parent=1 // pred_region
      %s451 = ssub.s32 128, 128
      %452 = vsyncadd [#allocation4], %s451
      %s454 = sshll.u32 [#allocation7], 4
      %s455 = int_to_ptr.vmem [resolvable:$true] %s454
      %457 = dma.vmem_to_hbm [thread:$0]  %s455, 128, %s4, [#allocation4]
    $region29: #{tpu_custom_call.1} parent=1 // pred_fallthru
      _
    // Predicated region
    $region30: #{tpu_custom_call.1} parent=1 // pred_check
      _
    $region31: #{tpu_custom_call.1} parent=1 // pred_check_branch
      %459 = sbr.rel (0) target = $region33
    $region32: #{tpu_custom_call.1} parent=1 // pred_region
      %s461 = ssub.s32 128, 128
      %462 = vsyncadd [#allocation9], %s461
      %s464 = sshll.u32 [#allocation8], 4
      %s465 = int_to_ptr.vmem [resolvable:$true] %s464
      %467 = dma.vmem_to_hbm [thread:$0]  %s465, 128, %s5, [#allocation9]
    $region33: #{tpu_custom_call.1} parent=1 // pred_fallthru
      _
    // Predicated region
    $region34: #{tpu_custom_call.1} parent=1 // pred_check
      _
    $region35: #{tpu_custom_call.1} parent=1 // pred_check_branch
      %469 = sbr.rel (0) target = $region37
    $region36: #{tpu_custom_call.1} parent=1 // pred_region
      %470 = dma.done [#allocation4], 128
    $region37: #{tpu_custom_call.1} parent=1 // pred_fallthru
      _
    // Predicated region
    $region38: #{tpu_custom_call.1} parent=1 // pred_check
      _
    $region39: #{tpu_custom_call.1} parent=1 // pred_check_branch
      %472 = sbr.rel (0) target = $region41
    $region40: #{tpu_custom_call.1} parent=1 // pred_region
      %473 = dma.done [#allocation9], 128
    $region41: #{tpu_custom_call.1} parent=1 // pred_fallthru
      _
    %474 = vsyncpa [#allocation3], 1
    %475 = vsyncpa [#allocation4], 1
    %476 = vsyncpa [#allocation9], 1
    %477 = vsyncpa [#allocation5], 1

</llo_original>
